<compile_context>
chip_gen: v7x
topology: tpu7x:2x2x1
jax: 0.10.0
libtpu: 0.0.40
codegen_flags: <defaults>
</compile_context>

<pallas_src>
import functools

import jax
import jax.numpy as jnp
from jax.experimental import pallas as pl
from jax.experimental.pallas import tpu as pltpu


def _round_up(x, m):
    return ((x + m - 1) // m) * m


def _mlp_kernel(x_ref, w1_ref, b1_ref, w2_ref, b2_ref, out_ref):
    # x_ref:  (TB, D_pad)    activation tile, incoming dtype (f32)
    # w1_ref: (D_pad, H_pad) first linear weight (in, out), compute dtype
    # b1_ref: (1, H_pad)     f32
    # w2_ref: (H_pad, C_pad) second linear weight, compute dtype
    # b2_ref: (1, C_pad)     f32; padded lanes hold -1e30
    # out_ref:(TB, C_pad)    softmax probabilities, f32
    x = x_ref[...].astype(w1_ref.dtype)          # in-register cast (no HBM copy)
    h = jnp.dot(x, w1_ref[...], preferred_element_type=jnp.float32) + b1_ref[...]
    h = jnp.maximum(h, 0.0)                      # ReLU (f32)
    logits = (
        jnp.dot(h.astype(w2_ref.dtype), w2_ref[...],
                preferred_element_type=jnp.float32)
        + b2_ref[...]
    )
    # Padded class lanes: w2 padded cols are 0, b2 padded lanes are -1e30, so
    # logits there are exactly -1e30 and exp() below underflows them to 0.
    # No iota / compare / select needed in the kernel body.
    m = jnp.max(logits, axis=1, keepdims=True)
    e = jnp.exp(logits - m)
    denom = jnp.sum(e, axis=1, keepdims=True)
    out_ref[...] = (e * pl.reciprocal(denom, approx=True)).astype(out_ref.dtype)


def prepare_params(w1, b1, w2, b2, *, compute_dtype=jnp.bfloat16):
    """One-time weight/bias padding + casting (hoisted out of the forward)."""
    D, H = w1.shape
    C = w2.shape[1]
    D_pad = _round_up(D, 128)
    H_pad = _round_up(H, 128)   # pad to 256 on v6e/v7x if hidden grows non-toy
    C_pad = _round_up(C, 128)
    w1p = jnp.pad(w1, ((0, D_pad - D), (0, H_pad - H))).astype(compute_dtype)
    b1p = jnp.pad(b1.reshape(1, H), ((0, 0), (0, H_pad - H))).astype(jnp.float32)
    w2p = jnp.pad(w2, ((0, H_pad - H), (0, C_pad - C))).astype(compute_dtype)
    # Bias trick: padded class lanes get -1e30 so the kernel needs no mask.
    # Keep b2 in f32 (a bf16 -1e30 would saturate).
    b2p = jnp.pad(b2.reshape(1, C), ((0, 0), (0, C_pad - C)),
                  constant_values=-1e30).astype(jnp.float32)
    return w1p, b1p, w2p, b2p


@functools.partial(
    jax.jit,
    static_argnames=("input_size", "num_classes", "block_b", "vmem_budget_bytes"),
)
def mlp_forward(x, w1p, b1p, w2p, b2p, *, input_size, num_classes,
                block_b=512, vmem_budget_bytes=14 * 1024 * 1024):
    # Flatten exactly like the PyTorch forward (squeeze + reshape(-1, D)).
    x = x.reshape(-1, input_size)
    B = x.shape[0]
    D_pad, H_pad = w1p.shape
    C_pad = w2p.shape[1]

    # Only pad the feature dim when it is not already lane-aligned
    # (256 for 16x16 needs nothing; 784 for 28x28 would pad to 896).
    if D_pad != input_size:
        x = jnp.pad(x, ((0, 0), (0, D_pad - input_size)))

    x_item = x.dtype.itemsize
    w_item = w1p.dtype.itemsize

    # Batch tile: as large as block_b allows, shrunk to fit the VMEM budget
    # (conservative budget keeps us under v5e's 16 MiB scoped default and far
    # under v7x's 64 MiB physical VMEM).
    def step_vmem(tb):
        return (2 * tb * D_pad * x_item                      # x tile (dbl-buffered)
                + 2 * tb * C_pad * 4                         # out tile (dbl-buffered)
                + 2 * (D_pad * H_pad + H_pad * C_pad) * w_item  # pinned weights
                + 2 * (H_pad + C_pad) * 4                    # biases
                + tb * H_pad * 4)                            # h intermediate (f32)

    TB = min(_round_up(B, 8), block_b)
    while TB > 8 and step_vmem(TB) > vmem_budget_bytes:
        TB = _round_up(TB // 2, 8)

    grid = (pl.cdiv(B, TB),)   # partial last tile handled by Pallas store masking
    vmem_limit = int(min(max(2 * step_vmem(TB), 16 * 1024 * 1024),
                         48 * 1024 * 1024))

    cost = pl.CostEstimate(
        flops=2 * B * (D_pad * H_pad + H_pad * C_pad),
        transcendentals=B * C_pad,
        bytes_accessed=(B * D_pad * x_item
                        + (D_pad * H_pad + H_pad * C_pad) * w_item
                        + (H_pad + C_pad) * 4
                        + B * C_pad * 4),
    )

    out_padded = pl.pallas_call(
        _mlp_kernel,
        out_shape=jax.ShapeDtypeStruct((B, C_pad), jnp.float32),
        grid_spec=pltpu.PrefetchScalarGridSpec(
            num_scalar_prefetch=0,
            grid=grid,
            in_specs=[
                pl.BlockSpec((TB, D_pad), lambda i: (i, 0)),     # x tile
                pl.BlockSpec((D_pad, H_pad), lambda i: (0, 0)),  # w1 pinned
                pl.BlockSpec((1, H_pad), lambda i: (0, 0)),      # b1 pinned
                pl.BlockSpec((H_pad, C_pad), lambda i: (0, 0)),  # w2 pinned
                pl.BlockSpec((1, C_pad), lambda i: (0, 0)),      # b2 pinned
            ],
            out_specs=pl.BlockSpec((TB, C_pad), lambda i: (i, 0)),
        ),
        compiler_params=pltpu.CompilerParams(
            dimension_semantics=("parallel",),   # batch tiles across TCs (v7x)
            vmem_limit_bytes=vmem_limit,
        ),
        cost_estimate=cost,
    )(x, w1p, b1p, w2p, b2p)

    # Drop padded class lanes (padded probabilities are exactly 0 anyway).
    return out_padded[:, :num_classes]


def init_params(key, input_size, hidden=100, num_classes=10):
    # Deterministic synthetic init (Kaiming-uniform-ish, like torch defaults).
    k1, k2, k3, k4 = jax.random.split(key, 4)
    bound1 = 1.0 / jnp.sqrt(input_size)
    bound2 = 1.0 / jnp.sqrt(hidden)
    # Stored (in_features, out_features) so the kernel computes x @ W.
    w1 = jax.random.uniform(k1, (input_size, hidden), jnp.float32, -bound1, bound1)
    b1 = jax.random.uniform(k2, (1, hidden), jnp.float32, -bound1, bound1)
    w2 = jax.random.uniform(k3, (hidden, num_classes), jnp.float32, -bound2, bound2)
    b2 = jax.random.uniform(k4, (1, num_classes), jnp.float32, -bound2, bound2)
    return w1, b1, w2, b2


if __name__ == "__main__":
    # Small shapes consistent with the module: image_dim=(16,16), batch=2,
    # hidden=100, num_classes=10.
    image_dim = (16, 16)
    num_classes = 10
    hidden = 100
    batch = 2
    input_size = image_dim[0] * image_dim[1]

    key = jax.random.PRNGKey(0)
    kx, kp = jax.random.split(key)
    x = jax.random.normal(kx, (batch, 1, image_dim[0], image_dim[1]), jnp.float32)
    w1, b1, w2, b2 = init_params(kp, input_size, hidden, num_classes)

    # Pure-JAX reference (f32).
    xf = x.reshape(-1, input_size)
    ref = jax.nn.softmax(jnp.maximum(xf @ w1 + b1, 0.0) @ w2 + b2, axis=1)

    # Default path: bf16 matmul operands, f32 accumulation / softmax.
    w1p, b1p, w2p, b2p = prepare_params(w1, b1, w2, b2, compute_dtype=jnp.bfloat16)
    out = jax.block_until_ready(
        mlp_forward(x, w1p, b1p, w2p, b2p,
                    input_size=input_size, num_classes=num_classes))
    assert out.shape == (batch, num_classes)
    assert jnp.allclose(out, ref, atol=5e-2)
    assert jnp.allclose(jnp.sum(out, axis=1), 1.0, atol=5e-3)   # approx recip

    # f32 operand path: tight check against the reference.
    w1f, b1f, w2f, b2f = prepare_params(w1, b1, w2, b2, compute_dtype=jnp.float32)
    out_f32 = jax.block_until_ready(
        mlp_forward(x, w1f, b1f, w2f, b2f,
                    input_size=input_size, num_classes=num_classes))
    assert out_f32.shape == (batch, num_classes)
    assert jnp.allclose(out_f32, ref, atol=2e-3, rtol=1e-3)
    assert jnp.allclose(jnp.sum(out_f32, axis=1), 1.0, atol=5e-3)

    print("KERNEL_OK")
</pallas_src>

<mosaic_0001>
module attributes {stable_mosaic.version = 11 : i64} {
  func.func @_mlp_kernel(%arg0: i32, %arg1: memref<8x256xf32, #tpu.memory_space<vmem>>, %arg2: memref<256x128xbf16, #tpu.memory_space<vmem>>, %arg3: memref<1x128xf32, #tpu.memory_space<vmem>>, %arg4: memref<128x128xbf16, #tpu.memory_space<vmem>>, %arg5: memref<1x128xf32, #tpu.memory_space<vmem>>, %arg6: memref<8x128xf32, #tpu.memory_space<vmem>>) attributes {dimension_semantics = [#tpu.dimension_semantics<parallel>], iteration_bounds = array<i64: 1>, scalar_prefetch = 0 : i64, scratch_operands = 0 : i64, tpu.core_type = #tpu.core_type<tc>, window_params = [{transform_indices = @transform_0, window_bounds = array<i64: 8, 256>}, {pipeline_mode = #tpu.pipeline_mode<synchronous>, transform_indices = @transform_1, window_bounds = array<i64: 256, 128>}, {pipeline_mode = #tpu.pipeline_mode<synchronous>, transform_indices = @transform_2, window_bounds = array<i64: 1, 128>}, {pipeline_mode = #tpu.pipeline_mode<synchronous>, transform_indices = @transform_3, window_bounds = array<i64: 128, 128>}, {pipeline_mode = #tpu.pipeline_mode<synchronous>, transform_indices = @transform_4, window_bounds = array<i64: 1, 128>}, {transform_indices = @transform_5, window_bounds = array<i64: 8, 128>}]} {
    %c0 = arith.constant 0 : index
    %c0_0 = arith.constant 0 : index
    %0 = vector.load %arg1[%c0, %c0_0] : memref<8x256xf32, #tpu.memory_space<vmem>>, vector<8x256xf32>
    %1 = arith.truncf %0 : vector<8x256xf32> to vector<8x256xbf16>
    %c0_1 = arith.constant 0 : index
    %c0_2 = arith.constant 0 : index
    %2 = vector.load %arg2[%c0_1, %c0_2] : memref<256x128xbf16, #tpu.memory_space<vmem>>, vector<256x128xbf16>
    %cst = arith.constant dense<0.000000e+00> : vector<8x128xf32>
    %3 = tpu.matmul %1, %2, %cst {dimension_numbers = #tpu.dot_dimension_numbers<[1], [0], [0], [1], [0, 0, 1, 1], [], []>} : vector<8x256xbf16>, vector<256x128xbf16>, vector<8x128xf32> -> vector<8x128xf32>
    %c0_3 = arith.constant 0 : index
    %c0_4 = arith.constant 0 : index
    %4 = vector.load %arg3[%c0_3, %c0_4] : memref<1x128xf32, #tpu.memory_space<vmem>>, vector<1x128xf32>
    %5 = vector.broadcast %4 : vector<1x128xf32> to vector<8x128xf32>
    %6 = arith.addf %3, %5 : vector<8x128xf32>
    %cst_5 = arith.constant 0.000000e+00 : f32
    %7 = vector.broadcast %cst_5 : f32 to vector<8x128xf32>
    %8 = arith.maximumf %6, %7 : vector<8x128xf32>
    %9 = arith.truncf %8 : vector<8x128xf32> to vector<8x128xbf16>
    %c0_6 = arith.constant 0 : index
    %c0_7 = arith.constant 0 : index
    %10 = vector.load %arg4[%c0_6, %c0_7] : memref<128x128xbf16, #tpu.memory_space<vmem>>, vector<128x128xbf16>
    %cst_8 = arith.constant dense<0.000000e+00> : vector<8x128xf32>
    %11 = tpu.matmul %9, %10, %cst_8 {dimension_numbers = #tpu.dot_dimension_numbers<[1], [0], [0], [1], [0, 0, 1, 1], [], []>} : vector<8x128xbf16>, vector<128x128xbf16>, vector<8x128xf32> -> vector<8x128xf32>
    %c0_9 = arith.constant 0 : index
    %c0_10 = arith.constant 0 : index
    %12 = vector.load %arg5[%c0_9, %c0_10] : memref<1x128xf32, #tpu.memory_space<vmem>>, vector<1x128xf32>
    %13 = vector.broadcast %12 : vector<1x128xf32> to vector<8x128xf32>
    %14 = arith.addf %11, %13 : vector<8x128xf32>
    %cst_11 = arith.constant dense<0xFF800000> : vector<8xf32>
    %15 = vector.multi_reduction <maximumf>, %14, %cst_11 [1] : vector<8x128xf32> to vector<8xf32>
    %16 = vector.shape_cast %15 : vector<8xf32> to vector<8x1xf32>
    %17 = vector.broadcast %16 : vector<8x1xf32> to vector<8x128xf32>
    %18 = arith.subf %14, %17 : vector<8x128xf32>
    %19 = math.exp %18 : vector<8x128xf32>
    %cst_12 = arith.constant dense<0.000000e+00> : vector<8xf32>
    %20 = vector.multi_reduction <add>, %19, %cst_12 [1] : vector<8x128xf32> to vector<8xf32>
    %21 = vector.shape_cast %20 : vector<8xf32> to vector<8x1xf32>
    %22 = tpu.reciprocal %21 {approx = true} : vector<8x1xf32> -> vector<8x1xf32>
    %23 = vector.broadcast %22 : vector<8x1xf32> to vector<8x128xf32>
    %24 = arith.mulf %19, %23 : vector<8x128xf32>
    %c0_13 = arith.constant 0 : index
    %c0_14 = arith.constant 0 : index
    %25 = vector.load %arg6[%c0_13, %c0_14] : memref<8x128xf32, #tpu.memory_space<vmem>>, vector<8x128xf32>
    tpu.vector_store %arg6[%c0_13, %c0_14], %24 {strides = array<i32>} : memref<8x128xf32, #tpu.memory_space<vmem>>, vector<8x128xf32>,
    return
  }
  func.func @transform_0(%arg0: i32) -> (i32, i32) {
    %c0_i32 = arith.constant 0 : i32
    %c0_i32_0 = arith.constant 0 : i32
    return %arg0, %c0_i32 : i32, i32
  }
  func.func @transform_1(%arg0: i32) -> (i32, i32) {
    %c0_i32 = arith.constant 0 : i32
    %c0_i32_0 = arith.constant 0 : i32
    %c0_i32_1 = arith.constant 0 : i32
    return %c0_i32, %c0_i32_0 : i32, i32
  }
  func.func @transform_2(%arg0: i32) -> (i32, i32) {
    %c0_i32 = arith.constant 0 : i32
    %c0_i32_0 = arith.constant 0 : i32
    %c0_i32_1 = arith.constant 0 : i32
    return %c0_i32, %c0_i32_0 : i32, i32
  }
  func.func @transform_3(%arg0: i32) -> (i32, i32) {
    %c0_i32 = arith.constant 0 : i32
    %c0_i32_0 = arith.constant 0 : i32
    %c0_i32_1 = arith.constant 0 : i32
    return %c0_i32, %c0_i32_0 : i32, i32
  }
  func.func @transform_4(%arg0: i32) -> (i32, i32) {
    %c0_i32 = arith.constant 0 : i32
    %c0_i32_0 = arith.constant 0 : i32
    %c0_i32_1 = arith.constant 0 : i32
    return %c0_i32, %c0_i32_0 : i32, i32
  }
  func.func @transform_5(%arg0: i32) -> (i32, i32) {
    %c0_i32 = arith.constant 0 : i32
    %c0_i32_0 = arith.constant 0 : i32
    return %arg0, %c0_i32 : i32, i32
  }
}

</mosaic_0001>

<llo_original>
// kernel: mlp_forward.1
$region0: #{mlp_forward.1}
  #allocation0 [shape = 'u32[]', space=smem, size = 0x4, offset = 0x4, fixed_abs, tag = 'smem constant byte address 0x4 - core index']
  #allocation1 [shape = 'u32[144,128]{1,0:T(1,128)}', space=vmem, size = 0x12000, scoped, tag = 'internal scratch']
  %s0 = inlined_call_operand.vmem [shape: f32[2,256], index: 0, kind: input, shape index: {}]
  %s1 = inlined_call_operand.hbm [shape: bf16[256,128], index: 1, kind: input, shape index: {}]
  %s2 = inlined_call_operand.vmem [shape: f32[1,128], index: 2, kind: input, shape index: {}]
  %s3 = inlined_call_operand.hbm [shape: bf16[128,128], index: 3, kind: input, shape index: {}]
  %s4 = inlined_call_operand.vmem [shape: f32[1,128], index: 4, kind: input, shape index: {}]
  %s5 = inlined_call_operand.hbm [shape: f32[2,128], index: 5, kind: output, shape index: {}]
  %s6 = sld [smem:[#allocation0]]
  $region38: #{mlp_forward.1} parent=0
    _
  %s8 = ssub.s32 1, %s6
  %s9 = scalar_select 0, %s8, %s6
  $region1: #{mlp_forward.1} parent=0
    #allocation2 [shape = 'u8[65536]{0}', space=vmem, size = 0x10000, scoped, tag = 'input window, operand 1, single buffered']
    #allocation3 [shape = 's32[1]{0}', space=sflag, size = 0x4, scoped, tag = 'scoped memory for mlp_forward.1']
    #allocation4 [shape = 's32[1]{0}', space=sflag, size = 0x4, scoped, tag = 'scoped memory for mlp_forward.1']
    #allocation5 [shape = 'u8[32768]{0}', space=vmem, size = 0x8000, scoped, tag = 'input window, operand 3, single buffered']
    #allocation6 [shape = 's32[1]{0}', space=sflag, size = 0x4, scoped, tag = 'scoped memory for mlp_forward.1']
    #allocation7 [shape = 'u8[4096]{0}', space=vmem, size = 0x1000, scoped, tag = 'output window, operand 0, single buffered']
    %10 = vsyncpa [#allocation3], 0
    %11 = vsyncpa [#allocation6], 0
    %12 = vsyncpa [#allocation4], 0
    // Predicated region
    $region2: #{mlp_forward.1} parent=1 // pred_check
      _
    $region3: #{mlp_forward.1} parent=1 // pred_check_branch
      %14 = sbr.rel (0) target = $region5
    $region4: #{mlp_forward.1} parent=1 // pred_region
      _
    $region5: #{mlp_forward.1} parent=1 // pred_fallthru
      _
    // Predicated region
    $region6: #{mlp_forward.1} parent=1 // pred_check
      _
    $region7: #{mlp_forward.1} parent=1 // pred_check_branch
      %16 = sbr.rel (0) target = $region9
    $region8: #{mlp_forward.1} parent=1 // pred_region
      %s18 = ssub.s32 2048, 2048
      %19 = vsyncadd [#allocation3], %s18
      %s20 = sshll.u32 [#allocation2], 4
      %s21 = int_to_ptr.vmem [resolvable:$true] %s20
      %26 = dma.hbm_to_vmem [thread:$0]  %s1, 2048, %s21, [#allocation3], 64, 64, 4
    $region9: #{mlp_forward.1} parent=1 // pred_fallthru
      _
    // Predicated region
    $region10: #{mlp_forward.1} parent=1 // pred_check
      _
    $region11: #{mlp_forward.1} parent=1 // pred_check_branch
      %28 = sbr.rel (0) target = $region13
    $region12: #{mlp_forward.1} parent=1 // pred_region
      _
    $region13: #{mlp_forward.1} parent=1 // pred_fallthru
      _
    // Predicated region
    $region14: #{mlp_forward.1} parent=1 // pred_check
      _
    $region15: #{mlp_forward.1} parent=1 // pred_check_branch
      %30 = sbr.rel (0) target = $region17
    $region16: #{mlp_forward.1} parent=1 // pred_region
      %s32 = ssub.s32 1024, 1024
      %33 = vsyncadd [#allocation6], %s32
      %s34 = sshll.u32 [#allocation5], 4
      %s35 = int_to_ptr.vmem [resolvable:$true] %s34
      %40 = dma.hbm_to_vmem [thread:$0]  %s3, 1024, %s35, [#allocation6], 64, 64, 4
    $region17: #{mlp_forward.1} parent=1 // pred_fallthru
      _
    // Predicated region
    $region18: #{mlp_forward.1} parent=1 // pred_check
      _
    $region19: #{mlp_forward.1} parent=1 // pred_check_branch
      %42 = sbr.rel (0) target = $region21
    $region20: #{mlp_forward.1} parent=1 // pred_region
      _
    $region21: #{mlp_forward.1} parent=1 // pred_fallthru
      _
    // Predicated region
    $region22: #{mlp_forward.1} parent=1 // pred_check
      _
    $region23: #{mlp_forward.1} parent=1 // pred_check_branch
      %44 = sbr.rel (0) target = $region25
    $region24: #{mlp_forward.1} parent=1 // pred_region
      %45 = dma.done [#allocation3], 2048
    $region25: #{mlp_forward.1} parent=1 // pred_fallthru
      _
    // Predicated region
    $region26: #{mlp_forward.1} parent=1 // pred_check
      _
    $region27: #{mlp_forward.1} parent=1 // pred_check_branch
      %47 = sbr.rel (0) target = $region29
    $region28: #{mlp_forward.1} parent=1 // pred_region
      %48 = dma.done [#allocation6], 1024
    $region29: #{mlp_forward.1} parent=1 // pred_fallthru
      _
    %v50 = vld [vmem:[%s0] sm:$0xf]
    %v51 = vld [vmem:[%s0 + $0x4] sm:$0xf]
    %v52 = vld [vmem:[%s0 + $0x8] sm:$0xf]
    %v53 = vld [vmem:[%s0 + $0xc] sm:$0xf]
    %v58 = vcombine.low %v50, %v51
    %v59 = vcombine.low %v52, %v53
    %v61 = vunpack.c.l.s4 1983009808
    %v62 = vunpack.c.0.s8 %v61
    %v63 = vlaneseq
    %v64 = vshrl.u32 %v63, 7
    %v65 = vsub.s32 %v62, %v64
    %v66 = vrot.slane %v58, %v65
    %v68 = vunpack.c.l.s4 1983009808
    %v69 = vunpack.c.0.s8 %v68
    %v70 = vlaneseq
    %v71 = vshrl.u32 %v70, 7
    %v72 = vsub.s32 %v69, %v71
    %v73 = vrot.slane %v59, %v72
    %v74 = vcombine.low %v66, %v73
    %v75 = vcombine.high %v66, %v73
    %v78 = vpack.c.bf16 %v74, %v74
    %v79 = vpack.c.bf16 %v75, %v75
    %v80 = vld [vmem:[#allocation2] sm:$0xf]
    %v81 = vld [vmem:[#allocation2 + $0x4] sm:$0xf]
    %v82 = vld [vmem:[#allocation2 + $0x8] sm:$0xf]
    %v83 = vld [vmem:[#allocation2 + $0xc] sm:$0xf]
    %v84 = vld [vmem:[#allocation2 + $0x10] sm:$0xf]
    %v85 = vld [vmem:[#allocation2 + $0x14] sm:$0xf]
    %v86 = vld [vmem:[#allocation2 + $0x18] sm:$0xf]
    %v87 = vld [vmem:[#allocation2 + $0x1c] sm:$0xf]
    %v88 = vld [vmem:[#allocation2 + $0x20] sm:$0xf]
    %v89 = vld [vmem:[#allocation2 + $0x24] sm:$0xf]
    %v90 = vld [vmem:[#allocation2 + $0x28] sm:$0xf]
    %v91 = vld [vmem:[#allocation2 + $0x2c] sm:$0xf]
    %v92 = vld [vmem:[#allocation2 + $0x30] sm:$0xf]
    %v93 = vld [vmem:[#allocation2 + $0x34] sm:$0xf]
    %v94 = vld [vmem:[#allocation2 + $0x38] sm:$0xf]
    %v95 = vld [vmem:[#allocation2 + $0x3c] sm:$0xf]
    %v96 = vld [vmem:[#allocation2 + $0x40] sm:$0xf]
    %v97 = vld [vmem:[#allocation2 + $0x44] sm:$0xf]
    %v98 = vld [vmem:[#allocation2 + $0x48] sm:$0xf]
    %v99 = vld [vmem:[#allocation2 + $0x4c] sm:$0xf]
    %v100 = vld [vmem:[#allocation2 + $0x50] sm:$0xf]
    %v101 = vld [vmem:[#allocation2 + $0x54] sm:$0xf]
    %v102 = vld [vmem:[#allocation2 + $0x58] sm:$0xf]
    %v103 = vld [vmem:[#allocation2 + $0x5c] sm:$0xf]
    %v104 = vld [vmem:[#allocation2 + $0x60] sm:$0xf]
    %v105 = vld [vmem:[#allocation2 + $0x64] sm:$0xf]
    %v106 = vld [vmem:[#allocation2 + $0x68] sm:$0xf]
    %v107 = vld [vmem:[#allocation2 + $0x6c] sm:$0xf]
    %v108 = vld [vmem:[#allocation2 + $0x70] sm:$0xf]
    %v109 = vld [vmem:[#allocation2 + $0x74] sm:$0xf]
    %v110 = vld [vmem:[#allocation2 + $0x78] sm:$0xf]
    %v111 = vld [vmem:[#allocation2 + $0x7c] sm:$0xf]
    %v112 = vld [vmem:[%s2] sm:$0x1]
    %v114 = vlaneseq
    %v115 = vshrl.u32 %v114, 7
    %v116 = vsub.s32 0, %v115
    %v117 = vrot.slane %v112, %v116
    %v151 = vunpack.c.l.b16 %v80
    %v152 = vunpack.c.l.b16 %v81
    %v153 = vunpack.c.l.b16 %v82
    %v154 = vunpack.c.l.b16 %v83
    %v155 = vunpack.c.l.b16 %v84
    %v156 = vunpack.c.l.b16 %v85
    %v157 = vunpack.c.l.b16 %v86
    %v158 = vunpack.c.l.b16 %v87
    %v159 = vunpack.c.l.b16 %v88
    %v160 = vunpack.c.l.b16 %v89
    %v161 = vunpack.c.l.b16 %v90
    %v162 = vunpack.c.l.b16 %v91
    %v163 = vunpack.c.l.b16 %v92
    %v164 = vunpack.c.l.b16 %v93
    %v165 = vunpack.c.l.b16 %v94
    %v166 = vunpack.c.l.b16 %v95
    %v167 = vunpack.c.l.b16 %v96
    %v168 = vunpack.c.l.b16 %v97
    %v169 = vunpack.c.l.b16 %v98
    %v170 = vunpack.c.l.b16 %v99
    %v171 = vunpack.c.l.b16 %v100
    %v172 = vunpack.c.l.b16 %v101
    %v173 = vunpack.c.l.b16 %v102
    %v174 = vunpack.c.l.b16 %v103
    %v175 = vunpack.c.l.b16 %v104
    %v176 = vunpack.c.l.b16 %v105
    %v177 = vunpack.c.l.b16 %v106
    %v178 = vunpack.c.l.b16 %v107
    %v179 = vunpack.c.l.b16 %v108
    %v180 = vunpack.c.l.b16 %v109
    %v181 = vunpack.c.l.b16 %v110
    %v182 = vunpack.c.l.b16 %v111
    %v183 = vpack.c.b16 %v152, %v151
    %v184 = vpack.c.b16 %v154, %v153
    %v185 = vpack.c.b16 %v156, %v155
    %v186 = vpack.c.b16 %v158, %v157
    %v187 = vpack.c.b16 %v160, %v159
    %v188 = vpack.c.b16 %v162, %v161
    %v189 = vpack.c.b16 %v164, %v163
    %v190 = vpack.c.b16 %v166, %v165
    %v191 = vpack.c.b16 %v168, %v167
    %v192 = vpack.c.b16 %v170, %v169
    %v193 = vpack.c.b16 %v172, %v171
    %v194 = vpack.c.b16 %v174, %v173
    %v195 = vpack.c.b16 %v176, %v175
    %v196 = vpack.c.b16 %v178, %v177
    %v197 = vpack.c.b16 %v180, %v179
    %v198 = vpack.c.b16 %v182, %v181
    %215 = vmatprep.subr.bf16.mxu0 0
    %216 = vmatpush1.bf16.msra.mxu0 %v183
    %217 = vmatprep.subr.bf16.mxu0 0
    %218 = vmatpush1.bf16.msra.mxu0 %v184
    %219 = vmatprep.subr.bf16.mxu0 0
    %220 = vmatpush1.bf16.msra.mxu0 %v185
    %221 = vmatprep.subr.bf16.mxu0 0
    %222 = vmatpush1.bf16.msra.mxu0 %v186
    %223 = vmatprep.subr.bf16.mxu0 0
    %224 = vmatpush1.bf16.msra.mxu0 %v187
    %225 = vmatprep.subr.bf16.mxu0 0
    %226 = vmatpush1.bf16.msra.mxu0 %v188
    %227 = vmatprep.subr.bf16.mxu0 0
    %228 = vmatpush1.bf16.msra.mxu0 %v189
    %229 = vmatprep.subr.bf16.mxu0 0
    %230 = vmatpush1.bf16.msra.mxu0 %v190
    %231 = vmatprep.subr.bf16.mxu0 0
    %232 = vmatpush1.bf16.msra.mxu0 %v191
    %233 = vmatprep.subr.bf16.mxu0 0
    %234 = vmatpush1.bf16.msra.mxu0 %v192
    %235 = vmatprep.subr.bf16.mxu0 0
    %236 = vmatpush1.bf16.msra.mxu0 %v193
    %237 = vmatprep.subr.bf16.mxu0 0
    %238 = vmatpush1.bf16.msra.mxu0 %v194
    %239 = vmatprep.subr.bf16.mxu0 0
    %240 = vmatpush1.bf16.msra.mxu0 %v195
    %241 = vmatprep.subr.bf16.mxu0 0
    %242 = vmatpush1.bf16.msra.mxu0 %v196
    %243 = vmatprep.subr.bf16.mxu0 0
    %244 = vmatpush1.bf16.msra.mxu0 %v197
    %245 = vmatprep.subr.bf16.mxu0 0
    %246 = vmatpush1.bf16.msra.mxu0 %v198
    %247 = vmatprep.mubr.bf16.mxu0 %v79
    %248 = vmatmul.mubr.bf16.gmra.mrb[0].mxu0 %v78
    %v249 = vpop.f32.mrb[0].mxu0
    %v250 = vadd.f32 %v117, %v249
    %v251 = vpop.f32.mrb[0].mxu0
    %v252 = vpop.f32.mrb[0].mxu0
    %v253 = vpop.f32.mrb[0].mxu0
    %254 = vdwg.mxu0
    %v255 = vmax.f32 %v250, 0.0
    %v256 = vpack.c.bf16 %v255, %v255
    %v257 = vld [vmem:[#allocation5] sm:$0xf]
    %v258 = vld [vmem:[#allocation5 + $0x4] sm:$0xf]
    %v259 = vld [vmem:[#allocation5 + $0x8] sm:$0xf]
    %v260 = vld [vmem:[#allocation5 + $0xc] sm:$0xf]
    %v261 = vld [vmem:[#allocation5 + $0x10] sm:$0xf]
    %v262 = vld [vmem:[#allocation5 + $0x14] sm:$0xf]
    %v263 = vld [vmem:[#allocation5 + $0x18] sm:$0xf]
    %v264 = vld [vmem:[#allocation5 + $0x1c] sm:$0xf]
    %v265 = vld [vmem:[#allocation5 + $0x20] sm:$0xf]
    %v266 = vld [vmem:[#allocation5 + $0x24] sm:$0xf]
    %v267 = vld [vmem:[#allocation5 + $0x28] sm:$0xf]
    %v268 = vld [vmem:[#allocation5 + $0x2c] sm:$0xf]
    %v269 = vld [vmem:[#allocation5 + $0x30] sm:$0xf]
    %v270 = vld [vmem:[#allocation5 + $0x34] sm:$0xf]
    %v271 = vld [vmem:[#allocation5 + $0x38] sm:$0xf]
    %v272 = vld [vmem:[#allocation5 + $0x3c] sm:$0xf]
    %v273 = vld [vmem:[%s4] sm:$0x1]
    %v275 = vlaneseq
    %v276 = vshrl.u32 %v275, 7
    %v277 = vsub.s32 0, %v276
    %v278 = vrot.slane %v273, %v277
    %v296 = vunpack.c.l.b16 %v257
    %v297 = vunpack.c.l.b16 %v258
    %v298 = vunpack.c.l.b16 %v259
    %v299 = vunpack.c.l.b16 %v260
    %v300 = vunpack.c.l.b16 %v261
    %v301 = vunpack.c.l.b16 %v262
    %v302 = vunpack.c.l.b16 %v263
    %v303 = vunpack.c.l.b16 %v264
    %v304 = vunpack.c.l.b16 %v265
    %v305 = vunpack.c.l.b16 %v266
    %v306 = vunpack.c.l.b16 %v267
    %v307 = vunpack.c.l.b16 %v268
    %v308 = vunpack.c.l.b16 %v269
    %v309 = vunpack.c.l.b16 %v270
    %v310 = vunpack.c.l.b16 %v271
    %v311 = vunpack.c.l.b16 %v272
    %v312 = vpack.c.b16 %v297, %v296
    %v313 = vpack.c.b16 %v299, %v298
    %v314 = vpack.c.b16 %v301, %v300
    %v315 = vpack.c.b16 %v303, %v302
    %v316 = vpack.c.b16 %v305, %v304
    %v317 = vpack.c.b16 %v307, %v306
    %v318 = vpack.c.b16 %v309, %v308
    %v319 = vpack.c.b16 %v311, %v310
    %328 = vmatprep.subr.bf16.mxu0 0
    %329 = vmatpush1.bf16.msra.mxu0 %v312
    %330 = vmatprep.subr.bf16.mxu0 0
    %331 = vmatpush1.bf16.msra.mxu0 %v313
    %332 = vmatprep.subr.bf16.mxu0 0
    %333 = vmatpush1.bf16.msra.mxu0 %v314
    %334 = vmatprep.subr.bf16.mxu0 0
    %335 = vmatpush1.bf16.msra.mxu0 %v315
    %336 = vmatprep.subr.bf16.mxu0 0
    %337 = vmatpush1.bf16.msra.mxu0 %v316
    %338 = vmatprep.subr.bf16.mxu0 0
    %339 = vmatpush1.bf16.msra.mxu0 %v317
    %340 = vmatprep.subr.bf16.mxu0 0
    %341 = vmatpush1.bf16.msra.mxu0 %v318
    %342 = vmatprep.subr.bf16.mxu0 0
    %343 = vmatpush1.bf16.msra.mxu0 %v319
    %344 = vmatprep.subr.bf16.mxu0 0
    %345 = vmatpush1.bf16.msra.mxu0 0
    %346 = vmatprep.subr.bf16.mxu0 0
    %347 = vmatpush1.bf16.msra.mxu0 0
    %348 = vmatprep.subr.bf16.mxu0 0
    %349 = vmatpush1.bf16.msra.mxu0 0
    %350 = vmatprep.subr.bf16.mxu0 0
    %351 = vmatpush1.bf16.msra.mxu0 0
    %352 = vmatprep.subr.bf16.mxu0 0
    %353 = vmatpush1.bf16.msra.mxu0 0
    %354 = vmatprep.subr.bf16.mxu0 0
    %355 = vmatpush1.bf16.msra.mxu0 0
    %356 = vmatprep.subr.bf16.mxu0 0
    %357 = vmatpush1.bf16.msra.mxu0 0
    %358 = vmatprep.subr.bf16.mxu0 0
    %359 = vmatpush1.bf16.msra.mxu0 0
    %360 = vmatprep.mubr.bf16.mxu0 0
    %361 = vmatmul.mubr.bf16.gmra.mrb[0].mxu0 %v256
    %v362 = vpop.f32.mrb[0].mxu0
    %v363 = vadd.f32 %v278, %v362
    %v364 = vpop.f32.mrb[0].mxu0
    %v365 = vpop.f32.mrb[0].mxu0
    %v366 = vpop.f32.mrb[0].mxu0
    %367 = vdwg.mxu0
    %368 = vmax.xlane.f32.xlu0 %v363
    %v369 = vpop.xlane.xlu0 %368
    %v370 = vsub.f32 %v363, %v369
    %v371 = vmul.f32 %v370, 1.442695
    %v372 = vpow.pop %v371
    %373 = vadd.xlane.f32.xlu0 %v372
    %v374 = vpop.xlane.xlu0 %373
    %v375 = vrcp.pop %v374
    %v376 = vmul.f32 %v372, %v375
    %377 = vst [vmem:[#allocation7] sm:$0xff] %v376
    // Predicated region
    $region30: #{mlp_forward.1} parent=1 // pred_check
      _
    $region31: #{mlp_forward.1} parent=1 // pred_check_branch
      %379 = sbr.rel (0) target = $region33
    $region32: #{mlp_forward.1} parent=1 // pred_region
      %s381 = ssub.s32 128, 32
      %382 = vsyncadd [#allocation4], %s381
      %s383 = sshll.u32 [#allocation7], 4
      %s384 = int_to_ptr.vmem [resolvable:$true] %s383
      %389 = dma.vmem_to_hbm [thread:$0]  %s384, 32, %s5, [#allocation4], 32, 32, 2
    $region33: #{mlp_forward.1} parent=1 // pred_fallthru
      _
    // Predicated region
    $region34: #{mlp_forward.1} parent=1 // pred_check
      _
    $region35: #{mlp_forward.1} parent=1 // pred_check_branch
      %391 = sbr.rel (0) target = $region37
    $region36: #{mlp_forward.1} parent=1 // pred_region
      %392 = dma.done [#allocation4], 128
    $region37: #{mlp_forward.1} parent=1 // pred_fallthru
      _
    %393 = vsyncpa [#allocation3], 1
    %394 = vsyncpa [#allocation6], 1
    %395 = vsyncpa [#allocation4], 1

</llo_original>
